<compile_context>
chip_gen: v6e
topology: v6e:2x2x1
jax: 0.10.0
libtpu: 0.0.40
codegen_flags: <defaults>
</compile_context>

<pallas_src>
import jax
import jax.numpy as jnp
from jax.experimental import pallas as pl
from jax.experimental.pallas import tpu as pltpu


def rnn_kernel(x_ref, wx_ref, wh_ref, bih_ref, wo_ref, bo_ref, y_ref):
    # x_ref:  (B, T, D)  whole sequence resident in VMEM (small problem)
    # wx_ref: (D, H)     input -> hidden weights (transposed Linear weight, x part)
    # wh_ref: (H, H)     hidden -> hidden weights (transposed Linear weight, h part)
    # bih_ref:(1, H)     input_to_hidden bias
    # wo_ref: (H, O)     hidden -> output weights
    # bo_ref: (1, O)     hidden_to_output bias
    # y_ref:  (B, O)     output
    B, T, D = x_ref.shape
    H = wh_ref.shape[0]

    # Hoist weight/bias loads out of the recurrence (read once).
    wx = wx_ref[...]
    wh = wh_ref[...]
    b_ih = bih_ref[...]

    # Hoist the input projection: one big MXU matmul instead of T tiny ones on
    # the latency-critical path.
    x_all = x_ref[...].reshape(B * T, D).astype(jnp.float32)
    x_proj = (
        jnp.dot(x_all, wx, preferred_element_type=jnp.float32) + b_ih
    ).reshape(B, T, H)

    # Recurrence: h carried in registers, fully unrolled (T is static and small),
    # only h @ Wh + add + tanh per step remains on the serial chain.
    h = jnp.zeros((B, H), jnp.float32)
    for t in range(T):
        h = jnp.tanh(
            x_proj[:, t, :]
            + jnp.dot(h, wh, preferred_element_type=jnp.float32)
        )

    y = jnp.dot(h, wo_ref[...], preferred_element_type=jnp.float32) + bo_ref[...]
    y_ref[...] = y.astype(y_ref.dtype)


def simple_rnn_forward(x, w_ih, b_ih, w_ho, b_ho):
    """x: (B, T, D); w_ih: (H, D+H); b_ih: (H,); w_ho: (O, H); b_ho: (O,)."""
    B, T, D = x.shape
    H = w_ih.shape[0]
    O = w_ho.shape[0]

    # Split the concatenated Linear weight: cat([x_t, h]) @ W_ih.T
    #   == x_t @ W_ih[:, :D].T + h @ W_ih[:, D:].T
    wx = jnp.transpose(w_ih[:, :D])   # (D, H)
    wh = jnp.transpose(w_ih[:, D:])   # (H, H)
    wo = jnp.transpose(w_ho)          # (H, O)

    vmem = pl.BlockSpec(memory_space=pltpu.MemorySpace.VMEM)

    return pl.pallas_call(
        rnn_kernel,
        out_shape=jax.ShapeDtypeStruct((B, O), x.dtype),
        in_specs=[vmem] * 6,
        out_specs=vmem,
    )(x, wx, wh, b_ih.reshape(1, H), wo, b_ho.reshape(1, O))


def xavier_uniform(key, shape):
    # PyTorch nn.init.xavier_uniform_ for Linear weight (out, in):
    # bound = sqrt(6 / (fan_in + fan_out))
    fan_out, fan_in = shape
    bound = (6.0 / (fan_in + fan_out)) ** 0.5
    return jax.random.uniform(key, shape, jnp.float32, -bound, bound)


def reference_forward(x, w_ih, b_ih, w_ho, b_ho):
    B, T, D = x.shape
    H = w_ih.shape[0]
    h = jnp.zeros((B, H), jnp.float32)
    for t in range(T):
        combined = jnp.concatenate([x[:, t, :], h], axis=1)
        h = jnp.tanh(combined @ w_ih.T + b_ih)
    return h @ w_ho.T + b_ho


if __name__ == "__main__":
    batch, seq, input_size, hidden_size, output_size = 2, 8, 16, 32, 8

    key = jax.random.PRNGKey(0)
    kx, k1, k2 = jax.random.split(key, 3)

    x = jax.random.normal(kx, (batch, seq, input_size), jnp.float32)
    w_ih = xavier_uniform(k1, (hidden_size, input_size + hidden_size))
    b_ih = jnp.zeros((hidden_size,), jnp.float32)
    w_ho = xavier_uniform(k2, (output_size, hidden_size))
    b_ho = jnp.zeros((output_size,), jnp.float32)

    y = simple_rnn_forward(x, w_ih, b_ih, w_ho, b_ho)
    y = jax.block_until_ready(y)

    y_ref = reference_forward(x, w_ih, b_ih, w_ho, b_ho)
    assert y.shape == (batch, output_size)
    assert jnp.allclose(y, y_ref, atol=1e-5, rtol=1e-5), "mismatch vs reference"

    print("KERNEL_OK")
</pallas_src>

<mosaic_0001>
module attributes {stable_mosaic.version = 11 : i64} {
  func.func @rnn_kernel(%arg0: memref<2x8x16xf32, #tpu.memory_space<vmem>>, %arg1: memref<16x32xf32, #tpu.memory_space<vmem>>, %arg2: memref<32x32xf32, #tpu.memory_space<vmem>>, %arg3: memref<1x32xf32, #tpu.memory_space<vmem>>, %arg4: memref<32x8xf32, #tpu.memory_space<vmem>>, %arg5: memref<1x8xf32, #tpu.memory_space<vmem>>, %arg6: memref<2x8xf32, #tpu.memory_space<vmem>>) attributes {dimension_semantics = [], scalar_prefetch = 0 : i64, scratch_operands = 0 : i64, tpu.core_type = #tpu.core_type<tc>} {
    %c0 = arith.constant 0 : index
    %c0_0 = arith.constant 0 : index
    %0 = vector.load %arg1[%c0, %c0_0] : memref<16x32xf32, #tpu.memory_space<vmem>>, vector<16x32xf32>
    %c0_1 = arith.constant 0 : index
    %c0_2 = arith.constant 0 : index
    %1 = vector.load %arg2[%c0_1, %c0_2] : memref<32x32xf32, #tpu.memory_space<vmem>>, vector<32x32xf32>
    %c0_3 = arith.constant 0 : index
    %c0_4 = arith.constant 0 : index
    %2 = vector.load %arg3[%c0_3, %c0_4] : memref<1x32xf32, #tpu.memory_space<vmem>>, vector<1x32xf32>
    %c0_5 = arith.constant 0 : index
    %c0_6 = arith.constant 0 : index
    %c0_7 = arith.constant 0 : index
    %3 = vector.load %arg0[%c0_5, %c0_6, %c0_7] : memref<2x8x16xf32, #tpu.memory_space<vmem>>, vector<2x8x16xf32>
    %4 = vector.shape_cast %3 : vector<2x8x16xf32> to vector<16x16xf32>
    %cst = arith.constant dense<0.000000e+00> : vector<16x32xf32>
    %5 = tpu.matmul %4, %0, %cst {dimension_numbers = #tpu.dot_dimension_numbers<[1], [0], [0], [1], [0, 0, 1, 1], [], []>} : vector<16x16xf32>, vector<16x32xf32>, vector<16x32xf32> -> vector<16x32xf32>
    %6 = vector.broadcast %2 : vector<1x32xf32> to vector<16x32xf32>
    %7 = arith.addf %5, %6 : vector<16x32xf32>
    %8 = vector.shape_cast %7 : vector<16x32xf32> to vector<2x8x32xf32>
    %cst_8 = arith.constant 0.000000e+00 : f32
    %9 = vector.broadcast %cst_8 : f32 to vector<2x32xf32>
    %10 = vector.extract_strided_slice %8 {offsets = [0, 0, 0], sizes = [2, 1, 32], strides = [1, 1, 1]} : vector<2x8x32xf32> to vector<2x1x32xf32>
    %11 = vector.shape_cast %10 : vector<2x1x32xf32> to vector<2x32xf32>
    %cst_9 = arith.constant dense<0.000000e+00> : vector<2x32xf32>
    %12 = tpu.matmul %9, %1, %cst_9 {dimension_numbers = #tpu.dot_dimension_numbers<[1], [0], [0], [1], [0, 0, 1, 1], [], []>} : vector<2x32xf32>, vector<32x32xf32>, vector<2x32xf32> -> vector<2x32xf32>
    %13 = arith.addf %11, %12 : vector<2x32xf32>
    %14 = math.tanh %13 : vector<2x32xf32>
    %15 = vector.extract_strided_slice %8 {offsets = [0, 1, 0], sizes = [2, 1, 32], strides = [1, 1, 1]} : vector<2x8x32xf32> to vector<2x1x32xf32>
    %16 = vector.shape_cast %15 : vector<2x1x32xf32> to vector<2x32xf32>
    %cst_10 = arith.constant dense<0.000000e+00> : vector<2x32xf32>
    %17 = tpu.matmul %14, %1, %cst_10 {dimension_numbers = #tpu.dot_dimension_numbers<[1], [0], [0], [1], [0, 0, 1, 1], [], []>} : vector<2x32xf32>, vector<32x32xf32>, vector<2x32xf32> -> vector<2x32xf32>
    %18 = arith.addf %16, %17 : vector<2x32xf32>
    %19 = math.tanh %18 : vector<2x32xf32>
    %20 = vector.extract_strided_slice %8 {offsets = [0, 2, 0], sizes = [2, 1, 32], strides = [1, 1, 1]} : vector<2x8x32xf32> to vector<2x1x32xf32>
    %21 = vector.shape_cast %20 : vector<2x1x32xf32> to vector<2x32xf32>
    %cst_11 = arith.constant dense<0.000000e+00> : vector<2x32xf32>
    %22 = tpu.matmul %19, %1, %cst_11 {dimension_numbers = #tpu.dot_dimension_numbers<[1], [0], [0], [1], [0, 0, 1, 1], [], []>} : vector<2x32xf32>, vector<32x32xf32>, vector<2x32xf32> -> vector<2x32xf32>
    %23 = arith.addf %21, %22 : vector<2x32xf32>
    %24 = math.tanh %23 : vector<2x32xf32>
    %25 = vector.extract_strided_slice %8 {offsets = [0, 3, 0], sizes = [2, 1, 32], strides = [1, 1, 1]} : vector<2x8x32xf32> to vector<2x1x32xf32>
    %26 = vector.shape_cast %25 : vector<2x1x32xf32> to vector<2x32xf32>
    %cst_12 = arith.constant dense<0.000000e+00> : vector<2x32xf32>
    %27 = tpu.matmul %24, %1, %cst_12 {dimension_numbers = #tpu.dot_dimension_numbers<[1], [0], [0], [1], [0, 0, 1, 1], [], []>} : vector<2x32xf32>, vector<32x32xf32>, vector<2x32xf32> -> vector<2x32xf32>
    %28 = arith.addf %26, %27 : vector<2x32xf32>
    %29 = math.tanh %28 : vector<2x32xf32>
    %30 = vector.extract_strided_slice %8 {offsets = [0, 4, 0], sizes = [2, 1, 32], strides = [1, 1, 1]} : vector<2x8x32xf32> to vector<2x1x32xf32>
    %31 = vector.shape_cast %30 : vector<2x1x32xf32> to vector<2x32xf32>
    %cst_13 = arith.constant dense<0.000000e+00> : vector<2x32xf32>
    %32 = tpu.matmul %29, %1, %cst_13 {dimension_numbers = #tpu.dot_dimension_numbers<[1], [0], [0], [1], [0, 0, 1, 1], [], []>} : vector<2x32xf32>, vector<32x32xf32>, vector<2x32xf32> -> vector<2x32xf32>
    %33 = arith.addf %31, %32 : vector<2x32xf32>
    %34 = math.tanh %33 : vector<2x32xf32>
    %35 = vector.extract_strided_slice %8 {offsets = [0, 5, 0], sizes = [2, 1, 32], strides = [1, 1, 1]} : vector<2x8x32xf32> to vector<2x1x32xf32>
    %36 = vector.shape_cast %35 : vector<2x1x32xf32> to vector<2x32xf32>
    %cst_14 = arith.constant dense<0.000000e+00> : vector<2x32xf32>
    %37 = tpu.matmul %34, %1, %cst_14 {dimension_numbers = #tpu.dot_dimension_numbers<[1], [0], [0], [1], [0, 0, 1, 1], [], []>} : vector<2x32xf32>, vector<32x32xf32>, vector<2x32xf32> -> vector<2x32xf32>
    %38 = arith.addf %36, %37 : vector<2x32xf32>
    %39 = math.tanh %38 : vector<2x32xf32>
    %40 = vector.extract_strided_slice %8 {offsets = [0, 6, 0], sizes = [2, 1, 32], strides = [1, 1, 1]} : vector<2x8x32xf32> to vector<2x1x32xf32>
    %41 = vector.shape_cast %40 : vector<2x1x32xf32> to vector<2x32xf32>
    %cst_15 = arith.constant dense<0.000000e+00> : vector<2x32xf32>
    %42 = tpu.matmul %39, %1, %cst_15 {dimension_numbers = #tpu.dot_dimension_numbers<[1], [0], [0], [1], [0, 0, 1, 1], [], []>} : vector<2x32xf32>, vector<32x32xf32>, vector<2x32xf32> -> vector<2x32xf32>
    %43 = arith.addf %41, %42 : vector<2x32xf32>
    %44 = math.tanh %43 : vector<2x32xf32>
    %45 = vector.extract_strided_slice %8 {offsets = [0, 7, 0], sizes = [2, 1, 32], strides = [1, 1, 1]} : vector<2x8x32xf32> to vector<2x1x32xf32>
    %46 = vector.shape_cast %45 : vector<2x1x32xf32> to vector<2x32xf32>
    %cst_16 = arith.constant dense<0.000000e+00> : vector<2x32xf32>
    %47 = tpu.matmul %44, %1, %cst_16 {dimension_numbers = #tpu.dot_dimension_numbers<[1], [0], [0], [1], [0, 0, 1, 1], [], []>} : vector<2x32xf32>, vector<32x32xf32>, vector<2x32xf32> -> vector<2x32xf32>
    %48 = arith.addf %46, %47 : vector<2x32xf32>
    %49 = math.tanh %48 : vector<2x32xf32>
    %c0_17 = arith.constant 0 : index
    %c0_18 = arith.constant 0 : index
    %50 = vector.load %arg4[%c0_17, %c0_18] : memref<32x8xf32, #tpu.memory_space<vmem>>, vector<32x8xf32>
    %cst_19 = arith.constant dense<0.000000e+00> : vector<2x8xf32>
    %51 = tpu.matmul %49, %50, %cst_19 {dimension_numbers = #tpu.dot_dimension_numbers<[1], [0], [0], [1], [0, 0, 1, 1], [], []>} : vector<2x32xf32>, vector<32x8xf32>, vector<2x8xf32> -> vector<2x8xf32>
    %c0_20 = arith.constant 0 : index
    %c0_21 = arith.constant 0 : index
    %52 = vector.load %arg5[%c0_20, %c0_21] : memref<1x8xf32, #tpu.memory_space<vmem>>, vector<1x8xf32>
    %53 = vector.broadcast %52 : vector<1x8xf32> to vector<2x8xf32>
    %54 = arith.addf %51, %53 : vector<2x8xf32>
    %c0_22 = arith.constant 0 : index
    %c0_23 = arith.constant 0 : index
    %55 = vector.load %arg6[%c0_22, %c0_23] : memref<2x8xf32, #tpu.memory_space<vmem>>, vector<2x8xf32>
    tpu.vector_store %arg6[%c0_22, %c0_23], %54 {strides = array<i32>} : memref<2x8xf32, #tpu.memory_space<vmem>>, vector<2x8xf32>,
    return
  }
}

</mosaic_0001>

<llo_original>
// kernel: tpu_custom_call.1
$region0: #{tpu_custom_call.1}
  #allocation0 [shape = 'u32[]', space=smem, size = 0x4, offset = 0x4, fixed_abs, tag = 'smem constant byte address 0x4 - core index']
  #allocation1 [shape = 'u32[144,128]{1,0:T(1,128)}', space=vmem, size = 0x12000, scoped, tag = 'internal scratch']
  %s0 = inlined_call_operand.hbm [shape: f32[2,8,16], index: 0, kind: input, shape index: {}]
  %s1 = inlined_call_operand.hbm [shape: f32[16,32], index: 1, kind: input, shape index: {}]
  %s2 = inlined_call_operand.vmem [shape: f32[32,32], index: 2, kind: input, shape index: {}]
  %s3 = inlined_call_operand.vmem [shape: f32[1,32], index: 3, kind: input, shape index: {}]
  %s4 = inlined_call_operand.vmem [shape: f32[32,8], index: 4, kind: input, shape index: {}]
  %s5 = inlined_call_operand.vmem [shape: f32[1,8], index: 5, kind: input, shape index: {}]
  %s6 = inlined_call_operand.hbm [shape: f32[2,8], index: 6, kind: output, shape index: {}]
  %s7 = sld [smem:[#allocation0]]
  $region42: #{tpu_custom_call.1} parent=0
    _
  %s9 = ssub.s32 1, %s7
  %s10 = scalar_select 0, %s9, %s7
  $region1: #{tpu_custom_call.1} parent=0
    #allocation2 [shape = 'u8[8192]{0}', space=vmem, size = 0x2000, scoped, tag = 'input window, operand 0, single buffered']
    #allocation3 [shape = 's32[1]{0}', space=sflag, size = 0x4, scoped, tag = 'scoped memory for tpu_custom_call.1']
    #allocation4 [shape = 's32[1]{0}', space=sflag, size = 0x4, scoped, tag = 'scoped memory for tpu_custom_call.1']
    #allocation5 [shape = 'u8[8192]{0}', space=vmem, size = 0x2000, scoped, tag = 'input window, operand 1, single buffered']
    #allocation6 [shape = 's32[1]{0}', space=sflag, size = 0x4, scoped, tag = 'scoped memory for tpu_custom_call.1']
    #allocation7 [shape = 'u8[1024]{0}', space=vmem, size = 0x400, scoped, tag = 'output window, operand 0, single buffered']
    %11 = vsyncpa [#allocation3], 0
    %12 = vsyncpa [#allocation6], 0
    %13 = vsyncpa [#allocation4], 0
    // Predicated region
    $region2: #{tpu_custom_call.1} parent=1 // pred_check
      _
    $region3: #{tpu_custom_call.1} parent=1 // pred_check_branch
      %15 = sbr.rel (0) target = $region5
    $region4: #{tpu_custom_call.1} parent=1 // pred_region
      %s17 = ssub.s32 256, 256
      %18 = vsyncadd [#allocation3], %s17
      %s19 = sshll.u32 [#allocation2], 4
      %s20 = int_to_ptr.vmem [resolvable:$true] %s19
      %25 = dma.hbm_to_vmem [thread:$0]  %s0, 256, %s20, [#allocation3], 128, 128, 8
    $region5: #{tpu_custom_call.1} parent=1 // pred_fallthru
      _
    // Predicated region
    $region6: #{tpu_custom_call.1} parent=1 // pred_check
      _
    $region7: #{tpu_custom_call.1} parent=1 // pred_check_branch
      %27 = sbr.rel (0) target = $region9
    $region8: #{tpu_custom_call.1} parent=1 // pred_region
      %s29 = ssub.s32 256, 256
      %30 = vsyncadd [#allocation6], %s29
      %s31 = sshll.u32 [#allocation5], 4
      %s32 = int_to_ptr.vmem [resolvable:$true] %s31
      %37 = dma.hbm_to_vmem [thread:$0]  %s1, 256, %s32, [#allocation6], 128, 128, 8
    $region9: #{tpu_custom_call.1} parent=1 // pred_fallthru
      _
    // Predicated region
    $region10: #{tpu_custom_call.1} parent=1 // pred_check
      _
    $region11: #{tpu_custom_call.1} parent=1 // pred_check_branch
      %39 = sbr.rel (0) target = $region13
    $region12: #{tpu_custom_call.1} parent=1 // pred_region
      _
    $region13: #{tpu_custom_call.1} parent=1 // pred_fallthru
      _
    // Predicated region
    $region14: #{tpu_custom_call.1} parent=1 // pred_check
      _
    $region15: #{tpu_custom_call.1} parent=1 // pred_check_branch
      %41 = sbr.rel (0) target = $region17
    $region16: #{tpu_custom_call.1} parent=1 // pred_region
      _
    $region17: #{tpu_custom_call.1} parent=1 // pred_fallthru
      _
    // Predicated region
    $region18: #{tpu_custom_call.1} parent=1 // pred_check
      _
    $region19: #{tpu_custom_call.1} parent=1 // pred_check_branch
      %43 = sbr.rel (0) target = $region21
    $region20: #{tpu_custom_call.1} parent=1 // pred_region
      _
    $region21: #{tpu_custom_call.1} parent=1 // pred_fallthru
      _
    // Predicated region
    $region22: #{tpu_custom_call.1} parent=1 // pred_check
      _
    $region23: #{tpu_custom_call.1} parent=1 // pred_check_branch
      %45 = sbr.rel (0) target = $region25
    $region24: #{tpu_custom_call.1} parent=1 // pred_region
      _
    $region25: #{tpu_custom_call.1} parent=1 // pred_fallthru
      _
    // Predicated region
    $region26: #{tpu_custom_call.1} parent=1 // pred_check
      _
    $region27: #{tpu_custom_call.1} parent=1 // pred_check_branch
      %47 = sbr.rel (0) target = $region29
    $region28: #{tpu_custom_call.1} parent=1 // pred_region
      %48 = dma.done [#allocation3], 256
    $region29: #{tpu_custom_call.1} parent=1 // pred_fallthru
      _
    // Predicated region
    $region30: #{tpu_custom_call.1} parent=1 // pred_check
      _
    $region31: #{tpu_custom_call.1} parent=1 // pred_check_branch
      %50 = sbr.rel (0) target = $region33
    $region32: #{tpu_custom_call.1} parent=1 // pred_region
      %51 = dma.done [#allocation6], 256
    $region33: #{tpu_custom_call.1} parent=1 // pred_fallthru
      _
    %v52 = vld [vmem:[#allocation5] sm:$0xff]
    %v53 = vld [vmem:[#allocation5 + $0x8] sm:$0xff]
    %v54 = vld [vmem:[%s2] sm:$0xff]
    %v55 = vld [vmem:[%s2 + $0x8] sm:$0xff]
    %v56 = vld [vmem:[%s2 + $0x10] sm:$0xff]
    %v57 = vld [vmem:[%s2 + $0x18] sm:$0xff]
    %v58 = vld [vmem:[%s3] sm:$0x1]
    %v59 = vld [vmem:[#allocation2] sm:$0xff]
    %v60 = vld [vmem:[#allocation2 + $0x8] sm:$0xff]
    %v62 = vlaneseq
    %v63 = vshrl.u32 %v62, 7
    %v64 = vsub.s32 0, %v63
    %v65 = vrot.slane %v58, %v64
    %vm67 = vcmask 130048
    %v69 = vsel %vm67, %v59, 0
    %v72 = vsel %vm67, %v60, 0
    %74 = vmatprep.subr.mxu0 0.0
    %75 = vmatpush1.msra.mxu0 0.0
    %76 = vmatprep.subr.mxu0 0.0
    %77 = vmatpush1.msra.mxu0 0.0
    %78 = vmatprep.subr.mxu0 0.0
    %79 = vmatpush1.msra.mxu0 0.0
    %80 = vmatprep.subr.mxu0 0.0
    %81 = vmatpush1.msra.mxu0 0.0
    %82 = vmatprep.subr.mxu0 0.0
    %83 = vmatpush1.msra.mxu0 0.0
    %84 = vmatprep.subr.mxu0 0.0
    %85 = vmatpush1.msra.mxu0 0.0
    %86 = vmatprep.subr.mxu0 0.0
    %87 = vmatpush1.msra.mxu0 0.0
    %88 = vmatprep.subr.mxu0 0.0
    %89 = vmatpush1.msra.mxu0 0.0
    %90 = vmatprep.subr.mxu0 0.0
    %91 = vmatpush1.msra.mxu0 0.0
    %92 = vmatprep.subr.mxu0 0.0
    %93 = vmatpush1.msra.mxu0 0.0
    %94 = vmatprep.subr.mxu0 0.0
    %95 = vmatpush1.msra.mxu0 0.0
    %96 = vmatprep.subr.mxu0 0.0
    %97 = vmatpush1.msra.mxu0 0.0
    %98 = vmatprep.subr.mxu0 0.0
    %99 = vmatpush1.msra.mxu0 0.0
    %100 = vmatprep.subr.mxu0 0.0
    %101 = vmatpush1.msra.mxu0 0.0
    %102 = vmatprep.subr.mxu0 0.0
    %103 = vmatpush1.msra.mxu0 %v53
    %104 = vmatprep.subr.mxu0 0.0
    %105 = vmatpush1.msra.mxu0 %v52
    %106 = vmatprep.subr.mxu0 0.0
    %107 = vmatpush2.msra.mxu0 0.0
    %108 = vmatprep.subr.mxu0 0.0
    %109 = vmatpush2.msra.mxu0 0.0
    %110 = vmatprep.subr.mxu0 0.0
    %111 = vmatpush2.msra.mxu0 0.0
    %112 = vmatprep.subr.mxu0 0.0
    %113 = vmatpush2.msra.mxu0 0.0
    %114 = vmatprep.subr.mxu0 0.0
    %115 = vmatpush2.msra.mxu0 0.0
    %116 = vmatprep.subr.mxu0 0.0
    %117 = vmatpush2.msra.mxu0 0.0
    %118 = vmatprep.subr.mxu0 0.0
    %119 = vmatpush2.msra.mxu0 0.0
    %120 = vmatprep.subr.mxu0 0.0
    %121 = vmatpush2.msra.mxu0 0.0
    %122 = vmatprep.subr.mxu0 0.0
    %123 = vmatpush2.msra.mxu0 0.0
    %124 = vmatprep.subr.mxu0 0.0
    %125 = vmatpush2.msra.mxu0 0.0
    %126 = vmatprep.subr.mxu0 0.0
    %127 = vmatpush2.msra.mxu0 0.0
    %128 = vmatprep.subr.mxu0 0.0
    %129 = vmatpush2.msra.mxu0 0.0
    %130 = vmatprep.subr.mxu0 0.0
    %131 = vmatpush2.msra.mxu0 0.0
    %132 = vmatprep.subr.mxu0 0.0
    %133 = vmatpush2.msra.mxu0 0.0
    %134 = vmatprep.subr.mxu0 0.0
    %135 = vmatpush2.msra.mxu0 0.0
    %136 = vmatprep.subr.mxu0 0.0
    %137 = vmatpush2.msra.mxu0 0.0
    %138 = vmatprep.mubr.f32.mxu0 0.0
    %139 = vmatmul.mubr.f32.gmra.mxu0 %v69
    %v140 = vpop.f32.mrf.mxu0
    %v141 = vadd.f32 %v65, %v140
    %v142 = vpop.f32.mrf.mxu0
    %143 = vmatprep.mubr.f32.mxu0 0.0
    %144 = vmatmul.mubr.f32.gmra.mxu0 %v72
    %v145 = vpop.f32.mrf.mxu0
    %v146 = vadd.f32 %v65, %v145
    %v147 = vpop.f32.mrf.mxu0
    %148 = vdwg.mxu0
    %vm149 = vcmask 261120
    %v151 = vsel %vm149, 0.0, 0
    %153 = vmatprep.subr.mxu0 0.0
    %154 = vmatpush1.msra.mxu0 0.0
    %155 = vmatprep.subr.mxu0 0.0
    %156 = vmatpush1.msra.mxu0 0.0
    %157 = vmatprep.subr.mxu0 0.0
    %158 = vmatpush1.msra.mxu0 0.0
    %159 = vmatprep.subr.mxu0 0.0
    %160 = vmatpush1.msra.mxu0 0.0
    %161 = vmatprep.subr.mxu0 0.0
    %162 = vmatpush1.msra.mxu0 0.0
    %163 = vmatprep.subr.mxu0 0.0
    %164 = vmatpush1.msra.mxu0 0.0
    %165 = vmatprep.subr.mxu0 0.0
    %166 = vmatpush1.msra.mxu0 0.0
    %167 = vmatprep.subr.mxu0 0.0
    %168 = vmatpush1.msra.mxu0 0.0
    %169 = vmatprep.subr.mxu0 0.0
    %170 = vmatpush1.msra.mxu0 0.0
    %171 = vmatprep.subr.mxu0 0.0
    %172 = vmatpush1.msra.mxu0 0.0
    %173 = vmatprep.subr.mxu0 0.0
    %174 = vmatpush1.msra.mxu0 0.0
    %175 = vmatprep.subr.mxu0 0.0
    %176 = vmatpush1.msra.mxu0 0.0
    %177 = vmatprep.subr.mxu0 0.0
    %178 = vmatpush1.msra.mxu0 %v57
    %179 = vmatprep.subr.mxu0 0.0
    %180 = vmatpush1.msra.mxu0 %v56
    %181 = vmatprep.subr.mxu0 0.0
    %182 = vmatpush1.msra.mxu0 %v55
    %183 = vmatprep.subr.mxu0 0.0
    %184 = vmatpush1.msra.mxu0 %v54
    %185 = vmatprep.subr.mxu0 0.0
    %186 = vmatpush2.msra.mxu0 0.0
    %187 = vmatprep.subr.mxu0 0.0
    %188 = vmatpush2.msra.mxu0 0.0
    %189 = vmatprep.subr.mxu0 0.0
    %190 = vmatpush2.msra.mxu0 0.0
    %191 = vmatprep.subr.mxu0 0.0
    %192 = vmatpush2.msra.mxu0 0.0
    %193 = vmatprep.subr.mxu0 0.0
    %194 = vmatpush2.msra.mxu0 0.0
    %195 = vmatprep.subr.mxu0 0.0
    %196 = vmatpush2.msra.mxu0 0.0
    %197 = vmatprep.subr.mxu0 0.0
    %198 = vmatpush2.msra.mxu0 0.0
    %199 = vmatprep.subr.mxu0 0.0
    %200 = vmatpush2.msra.mxu0 0.0
    %201 = vmatprep.subr.mxu0 0.0
    %202 = vmatpush2.msra.mxu0 0.0
    %203 = vmatprep.subr.mxu0 0.0
    %204 = vmatpush2.msra.mxu0 0.0
    %205 = vmatprep.subr.mxu0 0.0
    %206 = vmatpush2.msra.mxu0 0.0
    %207 = vmatprep.subr.mxu0 0.0
    %208 = vmatpush2.msra.mxu0 0.0
    %209 = vmatprep.subr.mxu0 0.0
    %210 = vmatpush2.msra.mxu0 0.0
    %211 = vmatprep.subr.mxu0 0.0
    %212 = vmatpush2.msra.mxu0 0.0
    %213 = vmatprep.subr.mxu0 0.0
    %214 = vmatpush2.msra.mxu0 0.0
    %215 = vmatprep.subr.mxu0 0.0
    %216 = vmatpush2.msra.mxu0 0.0
    %217 = vmatprep.mubr.f32.mxu0 0.0
    %218 = vmatmul.mubr.f32.gmra.mxu0 %v151
    %v219 = vpop.f32.mrf.mxu0
    %v220 = vadd.f32 0.0, %v219
    %v221 = vpop.f32.mrf.mxu0
    %222 = vdwg.mxu0
    %v224 = vrot.slane %v220, 1
    %v227 = vadd.f32 %v141, %v220
    %v228 = vadd.f32 %v146, %v224
    %v229 = vtanh.pop %v227
    %v230 = vtanh.pop %v228
    %v233 = vrot.slane %v230, 7
    %vm234 = vcmask 1041409
    %v235 = vsel %vm234, %v233, %v229
    %v236 = vsel %vm149, %v235, 0
    %238 = vmatprep.subr.mxu0 0.0
    %239 = vmatpush1.msra.mxu0 0.0
    %240 = vmatprep.subr.mxu0 0.0
    %241 = vmatpush1.msra.mxu0 0.0
    %242 = vmatprep.subr.mxu0 0.0
    %243 = vmatpush1.msra.mxu0 0.0
    %244 = vmatprep.subr.mxu0 0.0
    %245 = vmatpush1.msra.mxu0 0.0
    %246 = vmatprep.subr.mxu0 0.0
    %247 = vmatpush1.msra.mxu0 0.0
    %248 = vmatprep.subr.mxu0 0.0
    %249 = vmatpush1.msra.mxu0 0.0
    %250 = vmatprep.subr.mxu0 0.0
    %251 = vmatpush1.msra.mxu0 0.0
    %252 = vmatprep.subr.mxu0 0.0
    %253 = vmatpush1.msra.mxu0 0.0
    %254 = vmatprep.subr.mxu0 0.0
    %255 = vmatpush1.msra.mxu0 0.0
    %256 = vmatprep.subr.mxu0 0.0
    %257 = vmatpush1.msra.mxu0 0.0
    %258 = vmatprep.subr.mxu0 0.0
    %259 = vmatpush1.msra.mxu0 0.0
    %260 = vmatprep.subr.mxu0 0.0
    %261 = vmatpush1.msra.mxu0 0.0
    %262 = vmatprep.subr.mxu0 0.0
    %263 = vmatpush1.msra.mxu0 %v57
    %264 = vmatprep.subr.mxu0 0.0
    %265 = vmatpush1.msra.mxu0 %v56
    %266 = vmatprep.subr.mxu0 0.0
    %267 = vmatpush1.msra.mxu0 %v55
    %268 = vmatprep.subr.mxu0 0.0
    %269 = vmatpush1.msra.mxu0 %v54
    %270 = vmatprep.subr.mxu0 0.0
    %271 = vmatpush2.msra.mxu0 0.0
    %272 = vmatprep.subr.mxu0 0.0
    %273 = vmatpush2.msra.mxu0 0.0
    %274 = vmatprep.subr.mxu0 0.0
    %275 = vmatpush2.msra.mxu0 0.0
    %276 = vmatprep.subr.mxu0 0.0
    %277 = vmatpush2.msra.mxu0 0.0
    %278 = vmatprep.subr.mxu0 0.0
    %279 = vmatpush2.msra.mxu0 0.0
    %280 = vmatprep.subr.mxu0 0.0
    %281 = vmatpush2.msra.mxu0 0.0
    %282 = vmatprep.subr.mxu0 0.0
    %283 = vmatpush2.msra.mxu0 0.0
    %284 = vmatprep.subr.mxu0 0.0
    %285 = vmatpush2.msra.mxu0 0.0
    %286 = vmatprep.subr.mxu0 0.0
    %287 = vmatpush2.msra.mxu0 0.0
    %288 = vmatprep.subr.mxu0 0.0
    %289 = vmatpush2.msra.mxu0 0.0
    %290 = vmatprep.subr.mxu0 0.0
    %291 = vmatpush2.msra.mxu0 0.0
    %292 = vmatprep.subr.mxu0 0.0
    %293 = vmatpush2.msra.mxu0 0.0
    %294 = vmatprep.subr.mxu0 0.0
    %295 = vmatpush2.msra.mxu0 0.0
    %296 = vmatprep.subr.mxu0 0.0
    %297 = vmatpush2.msra.mxu0 0.0
    %298 = vmatprep.subr.mxu0 0.0
    %299 = vmatpush2.msra.mxu0 0.0
    %300 = vmatprep.subr.mxu0 0.0
    %301 = vmatpush2.msra.mxu0 0.0
    %302 = vmatprep.mubr.f32.mxu0 0.0
    %303 = vmatmul.mubr.f32.gmra.mxu0 %v236
    %v304 = vpop.f32.mrf.mxu0
    %v305 = vadd.f32 0.0, %v304
    %v306 = vpop.f32.mrf.mxu0
    %307 = vdwg.mxu0
    %v309 = vrot.slane %v305, 7
    %v312 = vadd.f32 %v141, %v309
    %v313 = vadd.f32 %v146, %v305
    %v314 = vtanh.pop %v312
    %v315 = vtanh.pop %v313
    %v318 = vrot.slane %v314, 1
    %v319 = vsel %vm234, %v315, %v318
    %v320 = vsel %vm149, %v319, 0
    %322 = vmatprep.subr.mxu0 0.0
    %323 = vmatpush1.msra.mxu0 0.0
    %324 = vmatprep.subr.mxu0 0.0
    %325 = vmatpush1.msra.mxu0 0.0
    %326 = vmatprep.subr.mxu0 0.0
    %327 = vmatpush1.msra.mxu0 0.0
    %328 = vmatprep.subr.mxu0 0.0
    %329 = vmatpush1.msra.mxu0 0.0
    %330 = vmatprep.subr.mxu0 0.0
    %331 = vmatpush1.msra.mxu0 0.0
    %332 = vmatprep.subr.mxu0 0.0
    %333 = vmatpush1.msra.mxu0 0.0
    %334 = vmatprep.subr.mxu0 0.0
    %335 = vmatpush1.msra.mxu0 0.0
    %336 = vmatprep.subr.mxu0 0.0
    %337 = vmatpush1.msra.mxu0 0.0
    %338 = vmatprep.subr.mxu0 0.0
    %339 = vmatpush1.msra.mxu0 0.0
    %340 = vmatprep.subr.mxu0 0.0
    %341 = vmatpush1.msra.mxu0 0.0
    %342 = vmatprep.subr.mxu0 0.0
    %343 = vmatpush1.msra.mxu0 0.0
    %344 = vmatprep.subr.mxu0 0.0
    %345 = vmatpush1.msra.mxu0 0.0
    %346 = vmatprep.subr.mxu0 0.0
    %347 = vmatpush1.msra.mxu0 %v57
    %348 = vmatprep.subr.mxu0 0.0
    %349 = vmatpush1.msra.mxu0 %v56
    %350 = vmatprep.subr.mxu0 0.0
    %351 = vmatpush1.msra.mxu0 %v55
    %352 = vmatprep.subr.mxu0 0.0
    %353 = vmatpush1.msra.mxu0 %v54
    %354 = vmatprep.subr.mxu0 0.0
    %355 = vmatpush2.msra.mxu0 0.0
    %356 = vmatprep.subr.mxu0 0.0
    %357 = vmatpush2.msra.mxu0 0.0
    %358 = vmatprep.subr.mxu0 0.0
    %359 = vmatpush2.msra.mxu0 0.0
    %360 = vmatprep.subr.mxu0 0.0
    %361 = vmatpush2.msra.mxu0 0.0
    %362 = vmatprep.subr.mxu0 0.0
    %363 = vmatpush2.msra.mxu0 0.0
    %364 = vmatprep.subr.mxu0 0.0
    %365 = vmatpush2.msra.mxu0 0.0
    %366 = vmatprep.subr.mxu0 0.0
    %367 = vmatpush2.msra.mxu0 0.0
    %368 = vmatprep.subr.mxu0 0.0
    %369 = vmatpush2.msra.mxu0 0.0
    %370 = vmatprep.subr.mxu0 0.0
    %371 = vmatpush2.msra.mxu0 0.0
    %372 = vmatprep.subr.mxu0 0.0
    %373 = vmatpush2.msra.mxu0 0.0
    %374 = vmatprep.subr.mxu0 0.0
    %375 = vmatpush2.msra.mxu0 0.0
    %376 = vmatprep.subr.mxu0 0.0
    %377 = vmatpush2.msra.mxu0 0.0
    %378 = vmatprep.subr.mxu0 0.0
    %379 = vmatpush2.msra.mxu0 0.0
    %380 = vmatprep.subr.mxu0 0.0
    %381 = vmatpush2.msra.mxu0 0.0
    %382 = vmatprep.subr.mxu0 0.0
    %383 = vmatpush2.msra.mxu0 0.0
    %384 = vmatprep.subr.mxu0 0.0
    %385 = vmatpush2.msra.mxu0 0.0
    %386 = vmatprep.mubr.f32.mxu0 0.0
    %387 = vmatmul.mubr.f32.gmra.mxu0 %v320
    %v388 = vpop.f32.mrf.mxu0
    %v389 = vadd.f32 0.0, %v388
    %v390 = vpop.f32.mrf.mxu0
    %391 = vdwg.mxu0
    %v393 = vrot.slane %v389, 6
    %v394 = vrot.slane %v389, 7
    %v397 = vadd.f32 %v141, %v393
    %v398 = vadd.f32 %v146, %v394
    %v399 = vtanh.pop %v397
    %v400 = vtanh.pop %v398
    %v403 = vrot.slane %v399, 2
    %v404 = vrot.slane %v400, 1
    %v405 = vsel %vm234, %v404, %v403
    %v406 = vsel %vm149, %v405, 0
    %408 = vmatprep.subr.mxu0 0.0
    %409 = vmatpush1.msra.mxu0 0.0
    %410 = vmatprep.subr.mxu0 0.0
    %411 = vmatpush1.msra.mxu0 0.0
    %412 = vmatprep.subr.mxu0 0.0
    %413 = vmatpush1.msra.mxu0 0.0
    %414 = vmatprep.subr.mxu0 0.0
    %415 = vmatpush1.msra.mxu0 0.0
    %416 = vmatprep.subr.mxu0 0.0
    %417 = vmatpush1.msra.mxu0 0.0
    %418 = vmatprep.subr.mxu0 0.0
    %419 = vmatpush1.msra.mxu0 0.0
    %420 = vmatprep.subr.mxu0 0.0
    %421 = vmatpush1.msra.mxu0 0.0
    %422 = vmatprep.subr.mxu0 0.0
    %423 = vmatpush1.msra.mxu0 0.0
    %424 = vmatprep.subr.mxu0 0.0
    %425 = vmatpush1.msra.mxu0 0.0
    %426 = vmatprep.subr.mxu0 0.0
    %427 = vmatpush1.msra.mxu0 0.0
    %428 = vmatprep.subr.mxu0 0.0
    %429 = vmatpush1.msra.mxu0 0.0
    %430 = vmatprep.subr.mxu0 0.0
    %431 = vmatpush1.msra.mxu0 0.0
    %432 = vmatprep.subr.mxu0 0.0
    %433 = vmatpush1.msra.mxu0 %v57
    %434 = vmatprep.subr.mxu0 0.0
    %435 = vmatpush1.msra.mxu0 %v56
    %436 = vmatprep.subr.mxu0 0.0
    %437 = vmatpush1.msra.mxu0 %v55
    %438 = vmatprep.subr.mxu0 0.0
    %439 = vmatpush1.msra.mxu0 %v54
    %440 = vmatprep.subr.mxu0 0.0
    %441 = vmatpush2.msra.mxu0 0.0
    %442 = vmatprep.subr.mxu0 0.0
    %443 = vmatpush2.msra.mxu0 0.0
    %444 = vmatprep.subr.mxu0 0.0
    %445 = vmatpush2.msra.mxu0 0.0
    %446 = vmatprep.subr.mxu0 0.0
    %447 = vmatpush2.msra.mxu0 0.0
    %448 = vmatprep.subr.mxu0 0.0
    %449 = vmatpush2.msra.mxu0 0.0
    %450 = vmatprep.subr.mxu0 0.0
    %451 = vmatpush2.msra.mxu0 0.0
    %452 = vmatprep.subr.mxu0 0.0
    %453 = vmatpush2.msra.mxu0 0.0
    %454 = vmatprep.subr.mxu0 0.0
    %455 = vmatpush2.msra.mxu0 0.0
    %456 = vmatprep.subr.mxu0 0.0
    %457 = vmatpush2.msra.mxu0 0.0
    %458 = vmatprep.subr.mxu0 0.0
    %459 = vmatpush2.msra.mxu0 0.0
    %460 = vmatprep.subr.mxu0 0.0
    %461 = vmatpush2.msra.mxu0 0.0
    %462 = vmatprep.subr.mxu0 0.0
    %463 = vmatpush2.msra.mxu0 0.0
    %464 = vmatprep.subr.mxu0 0.0
    %465 = vmatpush2.msra.mxu0 0.0
    %466 = vmatprep.subr.mxu0 0.0
    %467 = vmatpush2.msra.mxu0 0.0
    %468 = vmatprep.subr.mxu0 0.0
    %469 = vmatpush2.msra.mxu0 0.0
    %470 = vmatprep.subr.mxu0 0.0
    %471 = vmatpush2.msra.mxu0 0.0
    %472 = vmatprep.mubr.f32.mxu0 0.0
    %473 = vmatmul.mubr.f32.gmra.mxu0 %v406
    %v474 = vpop.f32.mrf.mxu0
    %v475 = vadd.f32 0.0, %v474
    %v476 = vpop.f32.mrf.mxu0
    %477 = vdwg.mxu0
    %v479 = vrot.slane %v475, 5
    %v480 = vrot.slane %v475, 6
    %v483 = vadd.f32 %v141, %v479
    %v484 = vadd.f32 %v146, %v480
    %v485 = vtanh.pop %v483
    %v486 = vtanh.pop %v484
    %v489 = vrot.slane %v485, 3
    %v490 = vrot.slane %v486, 2
    %v491 = vsel %vm234, %v490, %v489
    %v492 = vsel %vm149, %v491, 0
    %494 = vmatprep.subr.mxu0 0.0
    %495 = vmatpush1.msra.mxu0 0.0
    %496 = vmatprep.subr.mxu0 0.0
    %497 = vmatpush1.msra.mxu0 0.0
    %498 = vmatprep.subr.mxu0 0.0
    %499 = vmatpush1.msra.mxu0 0.0
    %500 = vmatprep.subr.mxu0 0.0
    %501 = vmatpush1.msra.mxu0 0.0
    %502 = vmatprep.subr.mxu0 0.0
    %503 = vmatpush1.msra.mxu0 0.0
    %504 = vmatprep.subr.mxu0 0.0
    %505 = vmatpush1.msra.mxu0 0.0
    %506 = vmatprep.subr.mxu0 0.0
    %507 = vmatpush1.msra.mxu0 0.0
    %508 = vmatprep.subr.mxu0 0.0
    %509 = vmatpush1.msra.mxu0 0.0
    %510 = vmatprep.subr.mxu0 0.0
    %511 = vmatpush1.msra.mxu0 0.0
    %512 = vmatprep.subr.mxu0 0.0
    %513 = vmatpush1.msra.mxu0 0.0
    %514 = vmatprep.subr.mxu0 0.0
    %515 = vmatpush1.msra.mxu0 0.0
    %516 = vmatprep.subr.mxu0 0.0
    %517 = vmatpush1.msra.mxu0 0.0
    %518 = vmatprep.subr.mxu0 0.0
    %519 = vmatpush1.msra.mxu0 %v57
    %520 = vmatprep.subr.mxu0 0.0
    %521 = vmatpush1.msra.mxu0 %v56
    %522 = vmatprep.subr.mxu0 0.0
    %523 = vmatpush1.msra.mxu0 %v55
    %524 = vmatprep.subr.mxu0 0.0
    %525 = vmatpush1.msra.mxu0 %v54
    %526 = vmatprep.subr.mxu0 0.0
    %527 = vmatpush2.msra.mxu0 0.0
    %528 = vmatprep.subr.mxu0 0.0
    %529 = vmatpush2.msra.mxu0 0.0
    %530 = vmatprep.subr.mxu0 0.0
    %531 = vmatpush2.msra.mxu0 0.0
    %532 = vmatprep.subr.mxu0 0.0
    %533 = vmatpush2.msra.mxu0 0.0
    %534 = vmatprep.subr.mxu0 0.0
    %535 = vmatpush2.msra.mxu0 0.0
    %536 = vmatprep.subr.mxu0 0.0
    %537 = vmatpush2.msra.mxu0 0.0
    %538 = vmatprep.subr.mxu0 0.0
    %539 = vmatpush2.msra.mxu0 0.0
    %540 = vmatprep.subr.mxu0 0.0
    %541 = vmatpush2.msra.mxu0 0.0
    %542 = vmatprep.subr.mxu0 0.0
    %543 = vmatpush2.msra.mxu0 0.0
    %544 = vmatprep.subr.mxu0 0.0
    %545 = vmatpush2.msra.mxu0 0.0
    %546 = vmatprep.subr.mxu0 0.0
    %547 = vmatpush2.msra.mxu0 0.0
    %548 = vmatprep.subr.mxu0 0.0
    %549 = vmatpush2.msra.mxu0 0.0
    %550 = vmatprep.subr.mxu0 0.0
    %551 = vmatpush2.msra.mxu0 0.0
    %552 = vmatprep.subr.mxu0 0.0
    %553 = vmatpush2.msra.mxu0 0.0
    %554 = vmatprep.subr.mxu0 0.0
    %555 = vmatpush2.msra.mxu0 0.0
    %556 = vmatprep.subr.mxu0 0.0
    %557 = vmatpush2.msra.mxu0 0.0
    %558 = vmatprep.mubr.f32.mxu0 0.0
    %559 = vmatmul.mubr.f32.gmra.mxu0 %v492
    %v560 = vpop.f32.mrf.mxu0
    %v561 = vadd.f32 0.0, %v560
    %v562 = vpop.f32.mrf.mxu0
    %563 = vdwg.mxu0
    %v565 = vrot.slane %v561, 4
    %v566 = vrot.slane %v561, 5
    %v569 = vadd.f32 %v141, %v565
    %v570 = vadd.f32 %v146, %v566
    %v571 = vtanh.pop %v569
    %v572 = vtanh.pop %v570
    %v575 = vrot.slane %v571, 4
    %v576 = vrot.slane %v572, 3
    %v577 = vsel %vm234, %v576, %v575
    %v578 = vsel %vm149, %v577, 0
    %580 = vmatprep.subr.mxu0 0.0
    %581 = vmatpush1.msra.mxu0 0.0
    %582 = vmatprep.subr.mxu0 0.0
    %583 = vmatpush1.msra.mxu0 0.0
    %584 = vmatprep.subr.mxu0 0.0
    %585 = vmatpush1.msra.mxu0 0.0
    %586 = vmatprep.subr.mxu0 0.0
    %587 = vmatpush1.msra.mxu0 0.0
    %588 = vmatprep.subr.mxu0 0.0
    %589 = vmatpush1.msra.mxu0 0.0
    %590 = vmatprep.subr.mxu0 0.0
    %591 = vmatpush1.msra.mxu0 0.0
    %592 = vmatprep.subr.mxu0 0.0
    %593 = vmatpush1.msra.mxu0 0.0
    %594 = vmatprep.subr.mxu0 0.0
    %595 = vmatpush1.msra.mxu0 0.0
    %596 = vmatprep.subr.mxu0 0.0
    %597 = vmatpush1.msra.mxu0 0.0
    %598 = vmatprep.subr.mxu0 0.0
    %599 = vmatpush1.msra.mxu0 0.0
    %600 = vmatprep.subr.mxu0 0.0
    %601 = vmatpush1.msra.mxu0 0.0
    %602 = vmatprep.subr.mxu0 0.0
    %603 = vmatpush1.msra.mxu0 0.0
    %604 = vmatprep.subr.mxu0 0.0
    %605 = vmatpush1.msra.mxu0 %v57
    %606 = vmatprep.subr.mxu0 0.0
    %607 = vmatpush1.msra.mxu0 %v56
    %608 = vmatprep.subr.mxu0 0.0
    %609 = vmatpush1.msra.mxu0 %v55
    %610 = vmatprep.subr.mxu0 0.0
    %611 = vmatpush1.msra.mxu0 %v54
    %612 = vmatprep.subr.mxu0 0.0
    %613 = vmatpush2.msra.mxu0 0.0
    %614 = vmatprep.subr.mxu0 0.0
    %615 = vmatpush2.msra.mxu0 0.0
    %616 = vmatprep.subr.mxu0 0.0
    %617 = vmatpush2.msra.mxu0 0.0
    %618 = vmatprep.subr.mxu0 0.0
    %619 = vmatpush2.msra.mxu0 0.0
    %620 = vmatprep.subr.mxu0 0.0
    %621 = vmatpush2.msra.mxu0 0.0
    %622 = vmatprep.subr.mxu0 0.0
    %623 = vmatpush2.msra.mxu0 0.0
    %624 = vmatprep.subr.mxu0 0.0
    %625 = vmatpush2.msra.mxu0 0.0
    %626 = vmatprep.subr.mxu0 0.0
    %627 = vmatpush2.msra.mxu0 0.0
    %628 = vmatprep.subr.mxu0 0.0
    %629 = vmatpush2.msra.mxu0 0.0
    %630 = vmatprep.subr.mxu0 0.0
    %631 = vmatpush2.msra.mxu0 0.0
    %632 = vmatprep.subr.mxu0 0.0
    %633 = vmatpush2.msra.mxu0 0.0
    %634 = vmatprep.subr.mxu0 0.0
    %635 = vmatpush2.msra.mxu0 0.0
    %636 = vmatprep.subr.mxu0 0.0
    %637 = vmatpush2.msra.mxu0 0.0
    %638 = vmatprep.subr.mxu0 0.0
    %639 = vmatpush2.msra.mxu0 0.0
    %640 = vmatprep.subr.mxu0 0.0
    %641 = vmatpush2.msra.mxu0 0.0
    %642 = vmatprep.subr.mxu0 0.0
    %643 = vmatpush2.msra.mxu0 0.0
    %644 = vmatprep.mubr.f32.mxu0 0.0
    %645 = vmatmul.mubr.f32.gmra.mxu0 %v578
    %v646 = vpop.f32.mrf.mxu0
    %v647 = vadd.f32 0.0, %v646
    %v648 = vpop.f32.mrf.mxu0
    %649 = vdwg.mxu0
    %v651 = vrot.slane %v647, 3
    %v652 = vrot.slane %v647, 4
    %v655 = vadd.f32 %v141, %v651
    %v656 = vadd.f32 %v146, %v652
    %v657 = vtanh.pop %v655
    %v658 = vtanh.pop %v656
    %v661 = vrot.slane %v657, 5
    %v662 = vrot.slane %v658, 4
    %v663 = vsel %vm234, %v662, %v661
    %v664 = vsel %vm149, %v663, 0
    %666 = vmatprep.subr.mxu0 0.0
    %667 = vmatpush1.msra.mxu0 0.0
    %668 = vmatprep.subr.mxu0 0.0
    %669 = vmatpush1.msra.mxu0 0.0
    %670 = vmatprep.subr.mxu0 0.0
    %671 = vmatpush1.msra.mxu0 0.0
    %672 = vmatprep.subr.mxu0 0.0
    %673 = vmatpush1.msra.mxu0 0.0
    %674 = vmatprep.subr.mxu0 0.0
    %675 = vmatpush1.msra.mxu0 0.0
    %676 = vmatprep.subr.mxu0 0.0
    %677 = vmatpush1.msra.mxu0 0.0
    %678 = vmatprep.subr.mxu0 0.0
    %679 = vmatpush1.msra.mxu0 0.0
    %680 = vmatprep.subr.mxu0 0.0
    %681 = vmatpush1.msra.mxu0 0.0
    %682 = vmatprep.subr.mxu0 0.0
    %683 = vmatpush1.msra.mxu0 0.0
    %684 = vmatprep.subr.mxu0 0.0
    %685 = vmatpush1.msra.mxu0 0.0
    %686 = vmatprep.subr.mxu0 0.0
    %687 = vmatpush1.msra.mxu0 0.0
    %688 = vmatprep.subr.mxu0 0.0
    %689 = vmatpush1.msra.mxu0 0.0
    %690 = vmatprep.subr.mxu0 0.0
    %691 = vmatpush1.msra.mxu0 %v57
    %692 = vmatprep.subr.mxu0 0.0
    %693 = vmatpush1.msra.mxu0 %v56
    %694 = vmatprep.subr.mxu0 0.0
    %695 = vmatpush1.msra.mxu0 %v55
    %696 = vmatprep.subr.mxu0 0.0
    %697 = vmatpush1.msra.mxu0 %v54
    %698 = vmatprep.subr.mxu0 0.0
    %699 = vmatpush2.msra.mxu0 0.0
    %700 = vmatprep.subr.mxu0 0.0
    %701 = vmatpush2.msra.mxu0 0.0
    %702 = vmatprep.subr.mxu0 0.0
    %703 = vmatpush2.msra.mxu0 0.0
    %704 = vmatprep.subr.mxu0 0.0
    %705 = vmatpush2.msra.mxu0 0.0
    %706 = vmatprep.subr.mxu0 0.0
    %707 = vmatpush2.msra.mxu0 0.0
    %708 = vmatprep.subr.mxu0 0.0
    %709 = vmatpush2.msra.mxu0 0.0
    %710 = vmatprep.subr.mxu0 0.0
    %711 = vmatpush2.msra.mxu0 0.0
    %712 = vmatprep.subr.mxu0 0.0
    %713 = vmatpush2.msra.mxu0 0.0
    %714 = vmatprep.subr.mxu0 0.0
    %715 = vmatpush2.msra.mxu0 0.0
    %716 = vmatprep.subr.mxu0 0.0
    %717 = vmatpush2.msra.mxu0 0.0
    %718 = vmatprep.subr.mxu0 0.0
    %719 = vmatpush2.msra.mxu0 0.0
    %720 = vmatprep.subr.mxu0 0.0
    %721 = vmatpush2.msra.mxu0 0.0
    %722 = vmatprep.subr.mxu0 0.0
    %723 = vmatpush2.msra.mxu0 0.0
    %724 = vmatprep.subr.mxu0 0.0
    %725 = vmatpush2.msra.mxu0 0.0
    %726 = vmatprep.subr.mxu0 0.0
    %727 = vmatpush2.msra.mxu0 0.0
    %728 = vmatprep.subr.mxu0 0.0
    %729 = vmatpush2.msra.mxu0 0.0
    %730 = vmatprep.mubr.f32.mxu0 0.0
    %731 = vmatmul.mubr.f32.gmra.mxu0 %v664
    %v732 = vpop.f32.mrf.mxu0
    %v733 = vadd.f32 0.0, %v732
    %v734 = vpop.f32.mrf.mxu0
    %735 = vdwg.mxu0
    %v737 = vrot.slane %v733, 2
    %v738 = vrot.slane %v733, 3
    %v741 = vadd.f32 %v141, %v737
    %v742 = vadd.f32 %v146, %v738
    %v743 = vtanh.pop %v741
    %v744 = vtanh.pop %v742
    %v747 = vrot.slane %v743, 6
    %v748 = vrot.slane %v744, 5
    %v749 = vsel %vm234, %v748, %v747
    %v750 = vsel %vm149, %v749, 0
    %752 = vmatprep.subr.mxu0 0.0
    %753 = vmatpush1.msra.mxu0 0.0
    %754 = vmatprep.subr.mxu0 0.0
    %755 = vmatpush1.msra.mxu0 0.0
    %756 = vmatprep.subr.mxu0 0.0
    %757 = vmatpush1.msra.mxu0 0.0
    %758 = vmatprep.subr.mxu0 0.0
    %759 = vmatpush1.msra.mxu0 0.0
    %760 = vmatprep.subr.mxu0 0.0
    %761 = vmatpush1.msra.mxu0 0.0
    %762 = vmatprep.subr.mxu0 0.0
    %763 = vmatpush1.msra.mxu0 0.0
    %764 = vmatprep.subr.mxu0 0.0
    %765 = vmatpush1.msra.mxu0 0.0
    %766 = vmatprep.subr.mxu0 0.0
    %767 = vmatpush1.msra.mxu0 0.0
    %768 = vmatprep.subr.mxu0 0.0
    %769 = vmatpush1.msra.mxu0 0.0
    %770 = vmatprep.subr.mxu0 0.0
    %771 = vmatpush1.msra.mxu0 0.0
    %772 = vmatprep.subr.mxu0 0.0
    %773 = vmatpush1.msra.mxu0 0.0
    %774 = vmatprep.subr.mxu0 0.0
    %775 = vmatpush1.msra.mxu0 0.0
    %776 = vmatprep.subr.mxu0 0.0
    %777 = vmatpush1.msra.mxu0 %v57
    %778 = vmatprep.subr.mxu0 0.0
    %779 = vmatpush1.msra.mxu0 %v56
    %780 = vmatprep.subr.mxu0 0.0
    %781 = vmatpush1.msra.mxu0 %v55
    %782 = vmatprep.subr.mxu0 0.0
    %783 = vmatpush1.msra.mxu0 %v54
    %784 = vmatprep.subr.mxu0 0.0
    %785 = vmatpush2.msra.mxu0 0.0
    %786 = vmatprep.subr.mxu0 0.0
    %787 = vmatpush2.msra.mxu0 0.0
    %788 = vmatprep.subr.mxu0 0.0
    %789 = vmatpush2.msra.mxu0 0.0
    %790 = vmatprep.subr.mxu0 0.0
    %791 = vmatpush2.msra.mxu0 0.0
    %792 = vmatprep.subr.mxu0 0.0
    %793 = vmatpush2.msra.mxu0 0.0
    %794 = vmatprep.subr.mxu0 0.0
    %795 = vmatpush2.msra.mxu0 0.0
    %796 = vmatprep.subr.mxu0 0.0
    %797 = vmatpush2.msra.mxu0 0.0
    %798 = vmatprep.subr.mxu0 0.0
    %799 = vmatpush2.msra.mxu0 0.0
    %800 = vmatprep.subr.mxu0 0.0
    %801 = vmatpush2.msra.mxu0 0.0
    %802 = vmatprep.subr.mxu0 0.0
    %803 = vmatpush2.msra.mxu0 0.0
    %804 = vmatprep.subr.mxu0 0.0
    %805 = vmatpush2.msra.mxu0 0.0
    %806 = vmatprep.subr.mxu0 0.0
    %807 = vmatpush2.msra.mxu0 0.0
    %808 = vmatprep.subr.mxu0 0.0
    %809 = vmatpush2.msra.mxu0 0.0
    %810 = vmatprep.subr.mxu0 0.0
    %811 = vmatpush2.msra.mxu0 0.0
    %812 = vmatprep.subr.mxu0 0.0
    %813 = vmatpush2.msra.mxu0 0.0
    %814 = vmatprep.subr.mxu0 0.0
    %815 = vmatpush2.msra.mxu0 0.0
    %816 = vmatprep.mubr.f32.mxu0 0.0
    %817 = vmatmul.mubr.f32.gmra.mxu0 %v750
    %v818 = vpop.f32.mrf.mxu0
    %v819 = vadd.f32 0.0, %v818
    %v820 = vpop.f32.mrf.mxu0
    %821 = vdwg.mxu0
    %v823 = vrot.slane %v819, 1
    %v824 = vrot.slane %v819, 2
    %v827 = vadd.f32 %v141, %v823
    %v828 = vadd.f32 %v146, %v824
    %v829 = vtanh.pop %v827
    %v830 = vtanh.pop %v828
    %v831 = vld [vmem:[%s4] sm:$0xff]
    %v832 = vld [vmem:[%s4 + $0x8] sm:$0xff]
    %v833 = vld [vmem:[%s4 + $0x10] sm:$0xff]
    %v834 = vld [vmem:[%s4 + $0x18] sm:$0xff]
    %v835 = vld [vmem:[%s5] sm:$0x1]
    %v837 = vlaneseq
    %v838 = vshrl.u32 %v837, 7
    %v839 = vsub.s32 0, %v838
    %v840 = vrot.slane %v835, %v839
    %v844 = vrot.slane %v829, 7
    %v845 = vrot.slane %v830, 6
    %v846 = vsel %vm234, %v845, %v844
    %v847 = vsel %vm149, %v846, 0
    %849 = vmatprep.subr.mxu0 0.0
    %850 = vmatpush1.msra.mxu0 0.0
    %851 = vmatprep.subr.mxu0 0.0
    %852 = vmatpush1.msra.mxu0 0.0
    %853 = vmatprep.subr.mxu0 0.0
    %854 = vmatpush1.msra.mxu0 0.0
    %855 = vmatprep.subr.mxu0 0.0
    %856 = vmatpush1.msra.mxu0 0.0
    %857 = vmatprep.subr.mxu0 0.0
    %858 = vmatpush1.msra.mxu0 0.0
    %859 = vmatprep.subr.mxu0 0.0
    %860 = vmatpush1.msra.mxu0 0.0
    %861 = vmatprep.subr.mxu0 0.0
    %862 = vmatpush1.msra.mxu0 0.0
    %863 = vmatprep.subr.mxu0 0.0
    %864 = vmatpush1.msra.mxu0 0.0
    %865 = vmatprep.subr.mxu0 0.0
    %866 = vmatpush1.msra.mxu0 0.0
    %867 = vmatprep.subr.mxu0 0.0
    %868 = vmatpush1.msra.mxu0 0.0
    %869 = vmatprep.subr.mxu0 0.0
    %870 = vmatpush1.msra.mxu0 0.0
    %871 = vmatprep.subr.mxu0 0.0
    %872 = vmatpush1.msra.mxu0 0.0
    %873 = vmatprep.subr.mxu0 0.0
    %874 = vmatpush1.msra.mxu0 %v834
    %875 = vmatprep.subr.mxu0 0.0
    %876 = vmatpush1.msra.mxu0 %v833
    %877 = vmatprep.subr.mxu0 0.0
    %878 = vmatpush1.msra.mxu0 %v832
    %879 = vmatprep.subr.mxu0 0.0
    %880 = vmatpush1.msra.mxu0 %v831
    %881 = vmatprep.subr.mxu0 0.0
    %882 = vmatpush2.msra.mxu0 0.0
    %883 = vmatprep.subr.mxu0 0.0
    %884 = vmatpush2.msra.mxu0 0.0
    %885 = vmatprep.subr.mxu0 0.0
    %886 = vmatpush2.msra.mxu0 0.0
    %887 = vmatprep.subr.mxu0 0.0
    %888 = vmatpush2.msra.mxu0 0.0
    %889 = vmatprep.subr.mxu0 0.0
    %890 = vmatpush2.msra.mxu0 0.0
    %891 = vmatprep.subr.mxu0 0.0
    %892 = vmatpush2.msra.mxu0 0.0
    %893 = vmatprep.subr.mxu0 0.0
    %894 = vmatpush2.msra.mxu0 0.0
    %895 = vmatprep.subr.mxu0 0.0
    %896 = vmatpush2.msra.mxu0 0.0
    %897 = vmatprep.subr.mxu0 0.0
    %898 = vmatpush2.msra.mxu0 0.0
    %899 = vmatprep.subr.mxu0 0.0
    %900 = vmatpush2.msra.mxu0 0.0
    %901 = vmatprep.subr.mxu0 0.0
    %902 = vmatpush2.msra.mxu0 0.0
    %903 = vmatprep.subr.mxu0 0.0
    %904 = vmatpush2.msra.mxu0 0.0
    %905 = vmatprep.subr.mxu0 0.0
    %906 = vmatpush2.msra.mxu0 0.0
    %907 = vmatprep.subr.mxu0 0.0
    %908 = vmatpush2.msra.mxu0 0.0
    %909 = vmatprep.subr.mxu0 0.0
    %910 = vmatpush2.msra.mxu0 0.0
    %911 = vmatprep.subr.mxu0 0.0
    %912 = vmatpush2.msra.mxu0 0.0
    %913 = vmatprep.mubr.f32.mxu0 0.0
    %914 = vmatmul.mubr.f32.gmra.mxu0 %v847
    %v915 = vpop.f32.mrf.mxu0
    %v916 = vadd.f32 %v840, %v915
    %v917 = vpop.f32.mrf.mxu0
    %918 = vdwg.mxu0
    %vm919 = vcmask 58368
    %920 = vst.msk [vmem:[#allocation7] sm:$0x3] %vm919, %v916
    // Predicated region
    $region34: #{tpu_custom_call.1} parent=1 // pred_check
      _
    $region35: #{tpu_custom_call.1} parent=1 // pred_check_branch
      %922 = sbr.rel (0) target = $region37
    $region36: #{tpu_custom_call.1} parent=1 // pred_region
      %s924 = ssub.s32 32, 32
      %925 = vsyncadd [#allocation4], %s924
      %s927 = sshll.u32 [#allocation7], 4
      %s928 = int_to_ptr.vmem [resolvable:$true] %s927
      %930 = dma.vmem_to_hbm [thread:$0]  %s928, 32, %s6, [#allocation4]
    $region37: #{tpu_custom_call.1} parent=1 // pred_fallthru
      _
    // Predicated region
    $region38: #{tpu_custom_call.1} parent=1 // pred_check
      _
    $region39: #{tpu_custom_call.1} parent=1 // pred_check_branch
      %932 = sbr.rel (0) target = $region41
    $region40: #{tpu_custom_call.1} parent=1 // pred_region
      %933 = dma.done [#allocation4], 32
    $region41: #{tpu_custom_call.1} parent=1 // pred_fallthru
      _
    %934 = vsyncpa [#allocation3], 1
    %935 = vsyncpa [#allocation6], 1
    %936 = vsyncpa [#allocation4], 1

</llo_original>
